<compile_context>
chip_gen: v7x
topology: tpu7x:2x2x1
jax: 0.10.0
libtpu: 0.0.40
codegen_flags: <defaults>
</compile_context>

<pallas_src>
import jax
import jax.numpy as jnp
from jax.experimental import pallas as pl
from jax.experimental.pallas import tpu as pltpu

_SUBLANE = 8


def _round_up(n, m):
    return ((n + m - 1) // m) * m


def _action_encoder_kernel(x_ref, w1_ref, b1_ref, w2_ref, b2_ref,
                           w3_ref, b3_ref, out_ref):
    # Fused 3-layer MLP; all operands for this batch tile are resident in VMEM.
    compute_dtype = x_ref.dtype            # bf16 (wrapper casts)

    x = x_ref[...]
    h1 = jnp.dot(x, w1_ref[...], preferred_element_type=jnp.float32) + b1_ref[...]
    h1 = jnp.maximum(h1, 0.0).astype(compute_dtype)           # ReLU

    h2 = jnp.dot(h1, w2_ref[...], preferred_element_type=jnp.float32) + b2_ref[...]
    h2 = jnp.maximum(h2, 0.0).astype(compute_dtype)           # ReLU

    h3 = jnp.dot(h2, w3_ref[...], preferred_element_type=jnp.float32) + b3_ref[...]
    out_ref[...] = h3.astype(out_ref.dtype)


def action_encoder_forward(x, params, *, compute_dtype=jnp.bfloat16,
                           out_dtype=jnp.float32):
    """x: (B, ...) with prod(...) == action_dim.  Returns (B, action_feat_dim)."""
    w1, b1, w2, b2, w3, b3 = (params[k] for k in
                              ("w1", "b1", "w2", "b2", "w3", "b3"))
    B = x.shape[0]
    action_dim = w1.shape[0]
    hidden = w1.shape[1]
    action_feat_dim = w3.shape[1]

    # Emulate PyTorch's x.view(batch_size, action_dim).
    x = x.reshape(B, action_dim)

    # Casts happen in the wrapper so XLA can fuse them into the producers.
    x = x.astype(compute_dtype)
    w1 = w1.astype(compute_dtype)
    w2 = w2.astype(compute_dtype)
    w3 = w3.astype(compute_dtype)
    b1 = b1.astype(jnp.float32)
    b2 = b2.astype(jnp.float32)
    b3 = b3.astype(jnp.float32)

    # ---- grid derivation: minimal number of steps ----------------------------
    # 1 step for small batches; 2 equal steps for large batches so v7x's two
    # TensorCores both get a tile (extra ~0.35 us step is negligible on
    # v5e/v6e).  Rows aligned to the packed-sublane granule of compute_dtype.
    b8 = _round_up(B, _SUBLANE)
    num_steps = 2 if b8 >= 256 else 1
    packing = max(1, 4 // jnp.dtype(compute_dtype).itemsize)   # 2 for bf16
    row_align = _SUBLANE * packing
    if num_steps == 1:
        tile_b = b8                       # block == full array dim -> legal
    else:
        tile_b = _round_up(pl.cdiv(b8, num_steps), row_align)
    Bp = tile_b * num_steps
    if Bp != B:
        x = jnp.pad(x, ((0, Bp - B), (0, 0)))

    flops = 2 * Bp * (action_dim * hidden + hidden * hidden
                      + hidden * action_feat_dim)
    bytes_accessed = (
        x.size * x.dtype.itemsize
        + w1.size * w1.dtype.itemsize
        + w2.size * w2.dtype.itemsize
        + w3.size * w3.dtype.itemsize
        + (b1.size + b2.size + b3.size) * 4
        + Bp * action_feat_dim * jnp.dtype(out_dtype).itemsize)

    out = pl.pallas_call(
        _action_encoder_kernel,
        out_shape=jax.ShapeDtypeStruct((Bp, action_feat_dim), out_dtype),
        grid_spec=pltpu.PrefetchScalarGridSpec(
            num_scalar_prefetch=0,
            grid=(num_steps,),
            in_specs=[
                # x: tiled over batch, full (small) feature dim.
                pl.BlockSpec((tile_b, action_dim), lambda i: (i, 0)),
                # weights / biases: whole arrays, same block every iteration
                # (Pallas skips re-DMA on unchanged block index).
                pl.BlockSpec((action_dim, hidden), lambda i: (0, 0)),
                pl.BlockSpec((1, hidden), lambda i: (0, 0)),
                pl.BlockSpec((hidden, hidden), lambda i: (0, 0)),
                pl.BlockSpec((1, hidden), lambda i: (0, 0)),
                pl.BlockSpec((hidden, action_feat_dim), lambda i: (0, 0)),
                pl.BlockSpec((1, action_feat_dim), lambda i: (0, 0)),
            ],
            out_specs=pl.BlockSpec((tile_b, action_feat_dim), lambda i: (i, 0)),
        ),
        compiler_params=pltpu.CompilerParams(
            dimension_semantics=("parallel",)),
        cost_estimate=pl.CostEstimate(flops=int(flops), transcendentals=0,
                                      bytes_accessed=int(bytes_accessed)),
    )(x, w1, b1, w2, b2, w3, b3)

    return out[:B] if Bp != B else out


def init_params(key, action_dim, action_feat_dim, hidden=128):
    """Deterministic synthetic parameters (shapes match the nn.Module).

    NOTE: real nn.Linear weights are stored (out_features, in_features);
    transpose them to (in, out) when loading into this layout.
    """
    k1, k2, k3, k4, k5, k6 = jax.random.split(key, 6)

    def lin(kw, kb, fan_in, fan_out):
        bound = 1.0 / jnp.sqrt(fan_in)
        w = jax.random.uniform(kw, (fan_in, fan_out), jnp.float32, -bound, bound)
        b = jax.random.uniform(kb, (1, fan_out), jnp.float32, -bound, bound)
        return w, b

    w1, b1 = lin(k1, k2, action_dim, hidden)
    w2, b2 = lin(k3, k4, hidden, hidden)
    w3, b3 = lin(k5, k6, hidden, action_feat_dim)
    return dict(w1=w1, b1=b1, w2=w2, b2=b2, w3=w3, b3=b3)


def _reference_forward(x, params, compute_dtype=jnp.bfloat16):
    # Mirrors the kernel's numerics: bf16 matmul inputs, f32 accumulation,
    # f32 bias add / ReLU.
    def c(a):
        return a.astype(compute_dtype).astype(jnp.float32)

    h1 = jax.nn.relu(c(x) @ c(params["w1"]) + params["b1"])
    h2 = jax.nn.relu(c(h1) @ c(params["w2"]) + params["b2"])
    return c(h2) @ c(params["w3"]) + params["b3"]


if __name__ == "__main__":
    key = jax.random.PRNGKey(0)
    kx, kp, kx2 = jax.random.split(key, 3)

    batch = 8
    action_dim = 16
    action_feat_dim = 32

    # Input may arrive with extra trailing dims in PyTorch; forward does
    # x.view(batch, action_dim) — the wrapper performs the same reshape.
    x_raw = jax.random.normal(kx, (batch, action_dim, 1), jnp.float32)
    x_flat = x_raw.reshape(batch, action_dim)

    params = init_params(kp, action_dim, action_feat_dim)

    # Small-batch case (single grid step, no padding, no output slice).
    out = jax.block_until_ready(action_encoder_forward(x_raw, params))
    ref = _reference_forward(x_flat, params)
    assert out.shape == (batch, action_feat_dim)
    assert jnp.allclose(out, ref, atol=2e-3, rtol=2e-3), "mismatch vs reference"

    # Larger batch exercises the 2-step grid (one tile per v7x TensorCore).
    x_big = jax.random.normal(kx2, (1024, action_dim), jnp.float32)
    out_big = jax.block_until_ready(action_encoder_forward(x_big, params))
    ref_big = _reference_forward(x_big, params)
    assert out_big.shape == (1024, action_feat_dim)
    assert jnp.allclose(out_big, ref_big, atol=2e-3, rtol=2e-3), \
        "mismatch vs reference (large batch)"

    print("KERNEL_OK")
</pallas_src>

<mosaic_0001>
module attributes {stable_mosaic.version = 11 : i64} {
  func.func @_action_encoder_kernel(%arg0: i32, %arg1: memref<8x16xbf16, #tpu.memory_space<vmem>>, %arg2: memref<16x128xbf16, #tpu.memory_space<vmem>>, %arg3: memref<1x128xf32, #tpu.memory_space<vmem>>, %arg4: memref<128x128xbf16, #tpu.memory_space<vmem>>, %arg5: memref<1x128xf32, #tpu.memory_space<vmem>>, %arg6: memref<128x32xbf16, #tpu.memory_space<vmem>>, %arg7: memref<1x32xf32, #tpu.memory_space<vmem>>, %arg8: memref<8x32xf32, #tpu.memory_space<vmem>>) attributes {dimension_semantics = [#tpu.dimension_semantics<parallel>], iteration_bounds = array<i64: 1>, scalar_prefetch = 0 : i64, scratch_operands = 0 : i64, tpu.core_type = #tpu.core_type<tc>, window_params = [{transform_indices = @transform_0, window_bounds = array<i64: 8, 16>}, {pipeline_mode = #tpu.pipeline_mode<synchronous>, transform_indices = @transform_1, window_bounds = array<i64: 16, 128>}, {pipeline_mode = #tpu.pipeline_mode<synchronous>, transform_indices = @transform_2, window_bounds = array<i64: 1, 128>}, {pipeline_mode = #tpu.pipeline_mode<synchronous>, transform_indices = @transform_3, window_bounds = array<i64: 128, 128>}, {pipeline_mode = #tpu.pipeline_mode<synchronous>, transform_indices = @transform_4, window_bounds = array<i64: 1, 128>}, {pipeline_mode = #tpu.pipeline_mode<synchronous>, transform_indices = @transform_5, window_bounds = array<i64: 128, 32>}, {pipeline_mode = #tpu.pipeline_mode<synchronous>, transform_indices = @transform_6, window_bounds = array<i64: 1, 32>}, {transform_indices = @transform_7, window_bounds = array<i64: 8, 32>}]} {
    %c0 = arith.constant 0 : index
    %c0_0 = arith.constant 0 : index
    %0 = vector.load %arg1[%c0, %c0_0] : memref<8x16xbf16, #tpu.memory_space<vmem>>, vector<8x16xbf16>
    %c0_1 = arith.constant 0 : index
    %c0_2 = arith.constant 0 : index
    %1 = vector.load %arg2[%c0_1, %c0_2] : memref<16x128xbf16, #tpu.memory_space<vmem>>, vector<16x128xbf16>
    %cst = arith.constant dense<0.000000e+00> : vector<8x128xf32>
    %2 = tpu.matmul %0, %1, %cst {dimension_numbers = #tpu.dot_dimension_numbers<[1], [0], [0], [1], [0, 0, 1, 1], [], []>} : vector<8x16xbf16>, vector<16x128xbf16>, vector<8x128xf32> -> vector<8x128xf32>
    %c0_3 = arith.constant 0 : index
    %c0_4 = arith.constant 0 : index
    %3 = vector.load %arg3[%c0_3, %c0_4] : memref<1x128xf32, #tpu.memory_space<vmem>>, vector<1x128xf32>
    %4 = vector.broadcast %3 : vector<1x128xf32> to vector<8x128xf32>
    %5 = arith.addf %2, %4 : vector<8x128xf32>
    %cst_5 = arith.constant 0.000000e+00 : f32
    %6 = vector.broadcast %cst_5 : f32 to vector<8x128xf32>
    %7 = arith.maximumf %5, %6 : vector<8x128xf32>
    %8 = arith.truncf %7 : vector<8x128xf32> to vector<8x128xbf16>
    %c0_6 = arith.constant 0 : index
    %c0_7 = arith.constant 0 : index
    %9 = vector.load %arg4[%c0_6, %c0_7] : memref<128x128xbf16, #tpu.memory_space<vmem>>, vector<128x128xbf16>
    %cst_8 = arith.constant dense<0.000000e+00> : vector<8x128xf32>
    %10 = tpu.matmul %8, %9, %cst_8 {dimension_numbers = #tpu.dot_dimension_numbers<[1], [0], [0], [1], [0, 0, 1, 1], [], []>} : vector<8x128xbf16>, vector<128x128xbf16>, vector<8x128xf32> -> vector<8x128xf32>
    %c0_9 = arith.constant 0 : index
    %c0_10 = arith.constant 0 : index
    %11 = vector.load %arg5[%c0_9, %c0_10] : memref<1x128xf32, #tpu.memory_space<vmem>>, vector<1x128xf32>
    %12 = vector.broadcast %11 : vector<1x128xf32> to vector<8x128xf32>
    %13 = arith.addf %10, %12 : vector<8x128xf32>
    %cst_11 = arith.constant 0.000000e+00 : f32
    %14 = vector.broadcast %cst_11 : f32 to vector<8x128xf32>
    %15 = arith.maximumf %13, %14 : vector<8x128xf32>
    %16 = arith.truncf %15 : vector<8x128xf32> to vector<8x128xbf16>
    %c0_12 = arith.constant 0 : index
    %c0_13 = arith.constant 0 : index
    %17 = vector.load %arg6[%c0_12, %c0_13] : memref<128x32xbf16, #tpu.memory_space<vmem>>, vector<128x32xbf16>
    %cst_14 = arith.constant dense<0.000000e+00> : vector<8x32xf32>
    %18 = tpu.matmul %16, %17, %cst_14 {dimension_numbers = #tpu.dot_dimension_numbers<[1], [0], [0], [1], [0, 0, 1, 1], [], []>} : vector<8x128xbf16>, vector<128x32xbf16>, vector<8x32xf32> -> vector<8x32xf32>
    %c0_15 = arith.constant 0 : index
    %c0_16 = arith.constant 0 : index
    %19 = vector.load %arg7[%c0_15, %c0_16] : memref<1x32xf32, #tpu.memory_space<vmem>>, vector<1x32xf32>
    %20 = vector.broadcast %19 : vector<1x32xf32> to vector<8x32xf32>
    %21 = arith.addf %18, %20 : vector<8x32xf32>
    %c0_17 = arith.constant 0 : index
    %c0_18 = arith.constant 0 : index
    %22 = vector.load %arg8[%c0_17, %c0_18] : memref<8x32xf32, #tpu.memory_space<vmem>>, vector<8x32xf32>
    tpu.vector_store %arg8[%c0_17, %c0_18], %21 {strides = array<i32>} : memref<8x32xf32, #tpu.memory_space<vmem>>, vector<8x32xf32>,
    return
  }
  func.func @transform_0(%arg0: i32) -> (i32, i32) {
    %c0_i32 = arith.constant 0 : i32
    %c0_i32_0 = arith.constant 0 : i32
    return %arg0, %c0_i32 : i32, i32
  }
  func.func @transform_1(%arg0: i32) -> (i32, i32) {
    %c0_i32 = arith.constant 0 : i32
    %c0_i32_0 = arith.constant 0 : i32
    %c0_i32_1 = arith.constant 0 : i32
    return %c0_i32, %c0_i32_0 : i32, i32
  }
  func.func @transform_2(%arg0: i32) -> (i32, i32) {
    %c0_i32 = arith.constant 0 : i32
    %c0_i32_0 = arith.constant 0 : i32
    %c0_i32_1 = arith.constant 0 : i32
    return %c0_i32, %c0_i32_0 : i32, i32
  }
  func.func @transform_3(%arg0: i32) -> (i32, i32) {
    %c0_i32 = arith.constant 0 : i32
    %c0_i32_0 = arith.constant 0 : i32
    %c0_i32_1 = arith.constant 0 : i32
    return %c0_i32, %c0_i32_0 : i32, i32
  }
  func.func @transform_4(%arg0: i32) -> (i32, i32) {
    %c0_i32 = arith.constant 0 : i32
    %c0_i32_0 = arith.constant 0 : i32
    %c0_i32_1 = arith.constant 0 : i32
    return %c0_i32, %c0_i32_0 : i32, i32
  }
  func.func @transform_5(%arg0: i32) -> (i32, i32) {
    %c0_i32 = arith.constant 0 : i32
    %c0_i32_0 = arith.constant 0 : i32
    %c0_i32_1 = arith.constant 0 : i32
    return %c0_i32, %c0_i32_0 : i32, i32
  }
  func.func @transform_6(%arg0: i32) -> (i32, i32) {
    %c0_i32 = arith.constant 0 : i32
    %c0_i32_0 = arith.constant 0 : i32
    %c0_i32_1 = arith.constant 0 : i32
    return %c0_i32, %c0_i32_0 : i32, i32
  }
  func.func @transform_7(%arg0: i32) -> (i32, i32) {
    %c0_i32 = arith.constant 0 : i32
    %c0_i32_0 = arith.constant 0 : i32
    return %arg0, %c0_i32 : i32, i32
  }
}

</mosaic_0001>

<llo_original>
// kernel: tpu_custom_call.1
$region0: #{tpu_custom_call.1}
  #allocation0 [shape = 'u32[]', space=smem, size = 0x4, offset = 0x4, fixed_abs, tag = 'smem constant byte address 0x4 - core index']
  #allocation1 [shape = 'u32[144,128]{1,0:T(1,128)}', space=vmem, size = 0x12000, scoped, tag = 'internal scratch']
  %s0 = inlined_call_operand.vmem [shape: bf16[8,16], index: 0, kind: input, shape index: {}]
  %s1 = inlined_call_operand.vmem [shape: bf16[16,128], index: 1, kind: input, shape index: {}]
  %s2 = inlined_call_operand.vmem [shape: f32[1,128], index: 2, kind: input, shape index: {}]
  %s3 = inlined_call_operand.vmem [shape: bf16[128,128], index: 3, kind: input, shape index: {}]
  %s4 = inlined_call_operand.vmem [shape: f32[1,128], index: 4, kind: input, shape index: {}]
  %s5 = inlined_call_operand.vmem [shape: bf16[128,32], index: 5, kind: input, shape index: {}]
  %s6 = inlined_call_operand.vmem [shape: f32[1,32], index: 6, kind: input, shape index: {}]
  %s7 = inlined_call_operand.hbm [shape: f32[8,32], index: 7, kind: output, shape index: {}]
  %s8 = sld [smem:[#allocation0]]
  $region38: #{tpu_custom_call.1} parent=0
    _
  %s10 = ssub.s32 1, %s8
  %s11 = scalar_select 0, %s10, %s8
  $region1: #{tpu_custom_call.1} parent=0
    #allocation2 [shape = 'u8[4096]{0}', space=vmem, size = 0x1000, scoped, tag = 'output window, operand 0, single buffered']
    #allocation3 [shape = 's32[1]{0}', space=sflag, size = 0x4, scoped, tag = 'scoped memory for tpu_custom_call.1']
    %12 = vsyncpa [#allocation3], 0
    // Predicated region
    $region2: #{tpu_custom_call.1} parent=1 // pred_check
      _
    $region3: #{tpu_custom_call.1} parent=1 // pred_check_branch
      %14 = sbr.rel (0) target = $region5
    $region4: #{tpu_custom_call.1} parent=1 // pred_region
      _
    $region5: #{tpu_custom_call.1} parent=1 // pred_fallthru
      _
    // Predicated region
    $region6: #{tpu_custom_call.1} parent=1 // pred_check
      _
    $region7: #{tpu_custom_call.1} parent=1 // pred_check_branch
      %16 = sbr.rel (0) target = $region9
    $region8: #{tpu_custom_call.1} parent=1 // pred_region
      _
    $region9: #{tpu_custom_call.1} parent=1 // pred_fallthru
      _
    // Predicated region
    $region10: #{tpu_custom_call.1} parent=1 // pred_check
      _
    $region11: #{tpu_custom_call.1} parent=1 // pred_check_branch
      %18 = sbr.rel (0) target = $region13
    $region12: #{tpu_custom_call.1} parent=1 // pred_region
      _
    $region13: #{tpu_custom_call.1} parent=1 // pred_fallthru
      _
    // Predicated region
    $region14: #{tpu_custom_call.1} parent=1 // pred_check
      _
    $region15: #{tpu_custom_call.1} parent=1 // pred_check_branch
      %20 = sbr.rel (0) target = $region17
    $region16: #{tpu_custom_call.1} parent=1 // pred_region
      _
    $region17: #{tpu_custom_call.1} parent=1 // pred_fallthru
      _
    // Predicated region
    $region18: #{tpu_custom_call.1} parent=1 // pred_check
      _
    $region19: #{tpu_custom_call.1} parent=1 // pred_check_branch
      %22 = sbr.rel (0) target = $region21
    $region20: #{tpu_custom_call.1} parent=1 // pred_region
      _
    $region21: #{tpu_custom_call.1} parent=1 // pred_fallthru
      _
    // Predicated region
    $region22: #{tpu_custom_call.1} parent=1 // pred_check
      _
    $region23: #{tpu_custom_call.1} parent=1 // pred_check_branch
      %24 = sbr.rel (0) target = $region25
    $region24: #{tpu_custom_call.1} parent=1 // pred_region
      _
    $region25: #{tpu_custom_call.1} parent=1 // pred_fallthru
      _
    // Predicated region
    $region26: #{tpu_custom_call.1} parent=1 // pred_check
      _
    $region27: #{tpu_custom_call.1} parent=1 // pred_check_branch
      %26 = sbr.rel (0) target = $region29
    $region28: #{tpu_custom_call.1} parent=1 // pred_region
      _
    $region29: #{tpu_custom_call.1} parent=1 // pred_fallthru
      _
    %v28 = vld [vmem:[%s0] sm:$0xf]
    %v29 = vld [vmem:[%s1] sm:$0xf]
    %v30 = vld [vmem:[%s1 + $0x4] sm:$0xf]
    %v31 = vld [vmem:[%s2] sm:$0x1]
    %v33 = vlaneseq
    %v34 = vshrl.u32 %v33, 7
    %v35 = vsub.s32 0, %v34
    %v36 = vrot.slane %v31, %v35
    %v40 = vunpack.c.l.b16 %v29
    %v41 = vunpack.c.l.b16 %v30
    %v42 = vpack.c.b16 %v41, %v40
    %vm44 = vcmask 130048
    %v46 = vsel %vm44, %v28, 0
    %48 = vmatprep.subr.bf16.mxu0 0
    %49 = vmatpush1.bf16.msra.mxu0 %v42
    %50 = vmatprep.subr.bf16.mxu0 0
    %51 = vmatpush1.bf16.msra.mxu0 0
    %52 = vmatprep.subr.bf16.mxu0 0
    %53 = vmatpush1.bf16.msra.mxu0 0
    %54 = vmatprep.subr.bf16.mxu0 0
    %55 = vmatpush1.bf16.msra.mxu0 0
    %56 = vmatprep.subr.bf16.mxu0 0
    %57 = vmatpush1.bf16.msra.mxu0 0
    %58 = vmatprep.subr.bf16.mxu0 0
    %59 = vmatpush1.bf16.msra.mxu0 0
    %60 = vmatprep.subr.bf16.mxu0 0
    %61 = vmatpush1.bf16.msra.mxu0 0
    %62 = vmatprep.subr.bf16.mxu0 0
    %63 = vmatpush1.bf16.msra.mxu0 0
    %64 = vmatprep.subr.bf16.mxu0 0
    %65 = vmatpush1.bf16.msra.mxu0 0
    %66 = vmatprep.subr.bf16.mxu0 0
    %67 = vmatpush1.bf16.msra.mxu0 0
    %68 = vmatprep.subr.bf16.mxu0 0
    %69 = vmatpush1.bf16.msra.mxu0 0
    %70 = vmatprep.subr.bf16.mxu0 0
    %71 = vmatpush1.bf16.msra.mxu0 0
    %72 = vmatprep.subr.bf16.mxu0 0
    %73 = vmatpush1.bf16.msra.mxu0 0
    %74 = vmatprep.subr.bf16.mxu0 0
    %75 = vmatpush1.bf16.msra.mxu0 0
    %76 = vmatprep.subr.bf16.mxu0 0
    %77 = vmatpush1.bf16.msra.mxu0 0
    %78 = vmatprep.subr.bf16.mxu0 0
    %79 = vmatpush1.bf16.msra.mxu0 0
    %80 = vmatprep.mubr.bf16.mxu0 0
    %81 = vmatmul.mubr.bf16.gmra.mrb[0].mxu0 %v46
    %v82 = vpop.f32.mrb[0].mxu0
    %v83 = vadd.f32 %v36, %v82
    %v84 = vpop.f32.mrb[0].mxu0
    %v85 = vpop.f32.mrb[0].mxu0
    %v86 = vpop.f32.mrb[0].mxu0
    %87 = vdwg.mxu0
    %v88 = vmax.f32 %v83, 0.0
    %v89 = vpack.c.bf16 %v88, %v88
    %v90 = vld [vmem:[%s3] sm:$0xf]
    %v91 = vld [vmem:[%s3 + $0x4] sm:$0xf]
    %v92 = vld [vmem:[%s3 + $0x8] sm:$0xf]
    %v93 = vld [vmem:[%s3 + $0xc] sm:$0xf]
    %v94 = vld [vmem:[%s3 + $0x10] sm:$0xf]
    %v95 = vld [vmem:[%s3 + $0x14] sm:$0xf]
    %v96 = vld [vmem:[%s3 + $0x18] sm:$0xf]
    %v97 = vld [vmem:[%s3 + $0x1c] sm:$0xf]
    %v98 = vld [vmem:[%s3 + $0x20] sm:$0xf]
    %v99 = vld [vmem:[%s3 + $0x24] sm:$0xf]
    %v100 = vld [vmem:[%s3 + $0x28] sm:$0xf]
    %v101 = vld [vmem:[%s3 + $0x2c] sm:$0xf]
    %v102 = vld [vmem:[%s3 + $0x30] sm:$0xf]
    %v103 = vld [vmem:[%s3 + $0x34] sm:$0xf]
    %v104 = vld [vmem:[%s3 + $0x38] sm:$0xf]
    %v105 = vld [vmem:[%s3 + $0x3c] sm:$0xf]
    %v106 = vld [vmem:[%s4] sm:$0x1]
    %v108 = vlaneseq
    %v109 = vshrl.u32 %v108, 7
    %v110 = vsub.s32 0, %v109
    %v111 = vrot.slane %v106, %v110
    %v129 = vunpack.c.l.b16 %v90
    %v130 = vunpack.c.l.b16 %v91
    %v131 = vunpack.c.l.b16 %v92
    %v132 = vunpack.c.l.b16 %v93
    %v133 = vunpack.c.l.b16 %v94
    %v134 = vunpack.c.l.b16 %v95
    %v135 = vunpack.c.l.b16 %v96
    %v136 = vunpack.c.l.b16 %v97
    %v137 = vunpack.c.l.b16 %v98
    %v138 = vunpack.c.l.b16 %v99
    %v139 = vunpack.c.l.b16 %v100
    %v140 = vunpack.c.l.b16 %v101
    %v141 = vunpack.c.l.b16 %v102
    %v142 = vunpack.c.l.b16 %v103
    %v143 = vunpack.c.l.b16 %v104
    %v144 = vunpack.c.l.b16 %v105
    %v145 = vpack.c.b16 %v130, %v129
    %v146 = vpack.c.b16 %v132, %v131
    %v147 = vpack.c.b16 %v134, %v133
    %v148 = vpack.c.b16 %v136, %v135
    %v149 = vpack.c.b16 %v138, %v137
    %v150 = vpack.c.b16 %v140, %v139
    %v151 = vpack.c.b16 %v142, %v141
    %v152 = vpack.c.b16 %v144, %v143
    %161 = vmatprep.subr.bf16.mxu0 0
    %162 = vmatpush1.bf16.msra.mxu0 %v145
    %163 = vmatprep.subr.bf16.mxu0 0
    %164 = vmatpush1.bf16.msra.mxu0 %v146
    %165 = vmatprep.subr.bf16.mxu0 0
    %166 = vmatpush1.bf16.msra.mxu0 %v147
    %167 = vmatprep.subr.bf16.mxu0 0
    %168 = vmatpush1.bf16.msra.mxu0 %v148
    %169 = vmatprep.subr.bf16.mxu0 0
    %170 = vmatpush1.bf16.msra.mxu0 %v149
    %171 = vmatprep.subr.bf16.mxu0 0
    %172 = vmatpush1.bf16.msra.mxu0 %v150
    %173 = vmatprep.subr.bf16.mxu0 0
    %174 = vmatpush1.bf16.msra.mxu0 %v151
    %175 = vmatprep.subr.bf16.mxu0 0
    %176 = vmatpush1.bf16.msra.mxu0 %v152
    %177 = vmatprep.subr.bf16.mxu0 0
    %178 = vmatpush1.bf16.msra.mxu0 0
    %179 = vmatprep.subr.bf16.mxu0 0
    %180 = vmatpush1.bf16.msra.mxu0 0
    %181 = vmatprep.subr.bf16.mxu0 0
    %182 = vmatpush1.bf16.msra.mxu0 0
    %183 = vmatprep.subr.bf16.mxu0 0
    %184 = vmatpush1.bf16.msra.mxu0 0
    %185 = vmatprep.subr.bf16.mxu0 0
    %186 = vmatpush1.bf16.msra.mxu0 0
    %187 = vmatprep.subr.bf16.mxu0 0
    %188 = vmatpush1.bf16.msra.mxu0 0
    %189 = vmatprep.subr.bf16.mxu0 0
    %190 = vmatpush1.bf16.msra.mxu0 0
    %191 = vmatprep.subr.bf16.mxu0 0
    %192 = vmatpush1.bf16.msra.mxu0 0
    %193 = vmatprep.mubr.bf16.mxu0 0
    %194 = vmatmul.mubr.bf16.gmra.mrb[0].mxu0 %v89
    %v195 = vpop.f32.mrb[0].mxu0
    %v196 = vadd.f32 %v111, %v195
    %v197 = vpop.f32.mrb[0].mxu0
    %v198 = vpop.f32.mrb[0].mxu0
    %v199 = vpop.f32.mrb[0].mxu0
    %200 = vdwg.mxu0
    %v201 = vmax.f32 %v196, 0.0
    %v202 = vpack.c.bf16 %v201, %v201
    %v203 = vld [vmem:[%s5] sm:$0xf]
    %v204 = vld [vmem:[%s5 + $0x4] sm:$0xf]
    %v205 = vld [vmem:[%s5 + $0x8] sm:$0xf]
    %v206 = vld [vmem:[%s5 + $0xc] sm:$0xf]
    %v207 = vld [vmem:[%s5 + $0x10] sm:$0xf]
    %v208 = vld [vmem:[%s5 + $0x14] sm:$0xf]
    %v209 = vld [vmem:[%s5 + $0x18] sm:$0xf]
    %v210 = vld [vmem:[%s5 + $0x1c] sm:$0xf]
    %v211 = vld [vmem:[%s5 + $0x20] sm:$0xf]
    %v212 = vld [vmem:[%s5 + $0x24] sm:$0xf]
    %v213 = vld [vmem:[%s5 + $0x28] sm:$0xf]
    %v214 = vld [vmem:[%s5 + $0x2c] sm:$0xf]
    %v215 = vld [vmem:[%s5 + $0x30] sm:$0xf]
    %v216 = vld [vmem:[%s5 + $0x34] sm:$0xf]
    %v217 = vld [vmem:[%s5 + $0x38] sm:$0xf]
    %v218 = vld [vmem:[%s5 + $0x3c] sm:$0xf]
    %v219 = vld [vmem:[%s6] sm:$0x1]
    %v221 = vlaneseq
    %v222 = vshrl.u32 %v221, 7
    %v223 = vsub.s32 0, %v222
    %v224 = vrot.slane %v219, %v223
    %v242 = vunpack.c.l.b16 %v203
    %v243 = vunpack.c.l.b16 %v204
    %v244 = vunpack.c.l.b16 %v205
    %v245 = vunpack.c.l.b16 %v206
    %v246 = vunpack.c.l.b16 %v207
    %v247 = vunpack.c.l.b16 %v208
    %v248 = vunpack.c.l.b16 %v209
    %v249 = vunpack.c.l.b16 %v210
    %v250 = vunpack.c.l.b16 %v211
    %v251 = vunpack.c.l.b16 %v212
    %v252 = vunpack.c.l.b16 %v213
    %v253 = vunpack.c.l.b16 %v214
    %v254 = vunpack.c.l.b16 %v215
    %v255 = vunpack.c.l.b16 %v216
    %v256 = vunpack.c.l.b16 %v217
    %v257 = vunpack.c.l.b16 %v218
    %v258 = vpack.c.b16 %v243, %v242
    %v259 = vpack.c.b16 %v245, %v244
    %v260 = vpack.c.b16 %v247, %v246
    %v261 = vpack.c.b16 %v249, %v248
    %v262 = vpack.c.b16 %v251, %v250
    %v263 = vpack.c.b16 %v253, %v252
    %v264 = vpack.c.b16 %v255, %v254
    %v265 = vpack.c.b16 %v257, %v256
    %274 = vmatprep.subr.bf16.mxu0 0
    %275 = vmatpush1.bf16.msra.mxu0 %v258
    %276 = vmatprep.subr.bf16.mxu0 0
    %277 = vmatpush1.bf16.msra.mxu0 %v259
    %278 = vmatprep.subr.bf16.mxu0 0
    %279 = vmatpush1.bf16.msra.mxu0 %v260
    %280 = vmatprep.subr.bf16.mxu0 0
    %281 = vmatpush1.bf16.msra.mxu0 %v261
    %282 = vmatprep.subr.bf16.mxu0 0
    %283 = vmatpush1.bf16.msra.mxu0 %v262
    %284 = vmatprep.subr.bf16.mxu0 0
    %285 = vmatpush1.bf16.msra.mxu0 %v263
    %286 = vmatprep.subr.bf16.mxu0 0
    %287 = vmatpush1.bf16.msra.mxu0 %v264
    %288 = vmatprep.subr.bf16.mxu0 0
    %289 = vmatpush1.bf16.msra.mxu0 %v265
    %290 = vmatprep.subr.bf16.mxu0 0
    %291 = vmatpush1.bf16.msra.mxu0 0
    %292 = vmatprep.subr.bf16.mxu0 0
    %293 = vmatpush1.bf16.msra.mxu0 0
    %294 = vmatprep.subr.bf16.mxu0 0
    %295 = vmatpush1.bf16.msra.mxu0 0
    %296 = vmatprep.subr.bf16.mxu0 0
    %297 = vmatpush1.bf16.msra.mxu0 0
    %298 = vmatprep.subr.bf16.mxu0 0
    %299 = vmatpush1.bf16.msra.mxu0 0
    %300 = vmatprep.subr.bf16.mxu0 0
    %301 = vmatpush1.bf16.msra.mxu0 0
    %302 = vmatprep.subr.bf16.mxu0 0
    %303 = vmatpush1.bf16.msra.mxu0 0
    %304 = vmatprep.subr.bf16.mxu0 0
    %305 = vmatpush1.bf16.msra.mxu0 0
    %306 = vmatprep.mubr.bf16.mxu0 0
    %307 = vmatmul.mubr.bf16.gmra.mrb[0].mxu0 %v202
    %v308 = vpop.f32.mrb[0].mxu0
    %v309 = vadd.f32 %v224, %v308
    %v310 = vpop.f32.mrb[0].mxu0
    %v311 = vpop.f32.mrb[0].mxu0
    %v312 = vpop.f32.mrb[0].mxu0
    %313 = vdwg.mxu0
    %vm314 = vcmask 261120
    %315 = vst.msk [vmem:[#allocation2] sm:$0xff] %vm314, %v309
    // Predicated region
    $region30: #{tpu_custom_call.1} parent=1 // pred_check
      _
    $region31: #{tpu_custom_call.1} parent=1 // pred_check_branch
      %317 = sbr.rel (0) target = $region33
    $region32: #{tpu_custom_call.1} parent=1 // pred_region
      %s319 = ssub.s32 128, 128
      %320 = vsyncadd [#allocation3], %s319
      %s322 = sshll.u32 [#allocation2], 4
      %s323 = int_to_ptr.vmem [resolvable:$true] %s322
      %325 = dma.vmem_to_hbm [thread:$0]  %s323, 128, %s7, [#allocation3]
    $region33: #{tpu_custom_call.1} parent=1 // pred_fallthru
      _
    // Predicated region
    $region34: #{tpu_custom_call.1} parent=1 // pred_check
      _
    $region35: #{tpu_custom_call.1} parent=1 // pred_check_branch
      %327 = sbr.rel (0) target = $region37
    $region36: #{tpu_custom_call.1} parent=1 // pred_region
      %328 = dma.done [#allocation3], 128
    $region37: #{tpu_custom_call.1} parent=1 // pred_fallthru
      _
    %329 = vsyncpa [#allocation3], 1

</llo_original>
